<compile_context>
chip_gen: v5e
topology: v5e:2x2
jax: 0.10.0
libtpu: 0.0.40
codegen_flags: <defaults>
</compile_context>

<pallas_src>
import functools

import jax
import jax.numpy as jnp
from jax.experimental import pallas as pl
from jax.experimental.pallas import tpu as pltpu


# ----------------------------------------------------------------------------
# Helpers
# ----------------------------------------------------------------------------
def _pick_tile(dim, target, quantum):
    """Largest tile <= target that divides `dim` and is a multiple of `quantum`;
    falls back to the full dim (always a legal Mosaic block)."""
    if dim <= target:
        return dim
    t = (target // quantum) * quantum
    while t >= quantum:
        if dim % t == 0:
            return t
        t -= quantum
    return dim


def _heads_per_block(n_heads, head_dim):
    """Smallest head count (dividing n_heads) whose lane width is a multiple of
    128; falls back to all heads (full d_model lane block)."""
    for k in range(1, n_heads):
        if n_heads % k == 0 and (head_dim * k) % 128 == 0:
            return k
    return n_heads


# ----------------------------------------------------------------------------
# Kernel 1: tiled dense layer  y = x @ W + b   (W stored as [d_in, d_out])
# ----------------------------------------------------------------------------
def _linear_kernel(x_ref, w_ref, b_ref, o_ref, acc_ref):
    k = pl.program_id(2)

    @pl.when(k == 0)
    def _init():
        acc_ref[...] = jnp.zeros(acc_ref.shape, jnp.float32)

    acc_ref[...] += jnp.dot(
        x_ref[...], w_ref[...], preferred_element_type=jnp.float32
    )

    @pl.when(k == pl.num_programs(2) - 1)
    def _finalize():
        o_ref[...] = (acc_ref[...] + b_ref[...].astype(jnp.float32)).astype(
            o_ref.dtype
        )


def linear(x2d, w, b2d, *, tm_target=512, tn_target=512, tk_target=1024):
    M, K = x2d.shape
    _, N = w.shape
    itemsize = x2d.dtype.itemsize
    m_quant = 16 if itemsize == 2 else 8        # bf16 sublane packing
    tm = _pick_tile(M, tm_target, m_quant)
    tn = _pick_tile(N, tn_target, 128)
    tk = _pick_tile(K, tk_target, 128)
    grid = (M // tm, N // tn, K // tk)
    cost = pl.CostEstimate(
        flops=int(2 * M * N * K),
        transcendentals=0,
        bytes_accessed=int((M * K + K * N + M * N) * itemsize + N * 4),
    )
    return pl.pallas_call(
        _linear_kernel,
        out_shape=jax.ShapeDtypeStruct((M, N), x2d.dtype),
        grid=grid,
        in_specs=[
            pl.BlockSpec((tm, tk), lambda i, j, k: (i, k)),
            pl.BlockSpec((tk, tn), lambda i, j, k: (k, j)),
            pl.BlockSpec((1, tn), lambda i, j, k: (0, j)),
        ],
        out_specs=pl.BlockSpec((tm, tn), lambda i, j, k: (i, j)),
        scratch_shapes=[pltpu.VMEM((tm, tn), jnp.float32)],
        compiler_params=pltpu.CompilerParams(
            dimension_semantics=("parallel", "parallel", "arbitrary")
        ),
        cost_estimate=cost,
    )(x2d, w, b2d)


# ----------------------------------------------------------------------------
# Kernel 2: flash-style attention, grid = (B, head_blocks, Sq/tq, Sk/tk).
# Each invocation sees a lane-dense [tq, hpb*hd] Q tile and [tk, hpb*hd] K/V
# tiles for one head block; per-head state lives head-major in scratch.
# ----------------------------------------------------------------------------
def _flash_attn_body(q_ref, k_ref, v_ref, mask_ref, o_ref, m_sc, l_sc, acc_sc,
                     *, heads_per_block, head_dim):
    kv_idx = pl.program_id(3)

    @pl.when(kv_idx == 0)
    def _init():
        m_sc[...] = jnp.full(m_sc.shape, -jnp.inf, jnp.float32)
        l_sc[...] = jnp.zeros(l_sc.shape, jnp.float32)
        acc_sc[...] = jnp.zeros(acc_sc.shape, jnp.float32)

    q = q_ref[0]                                  # (tq, hpb*hd); 1/scale already folded in
    k = k_ref[0]                                  # (tk, hpb*hd)
    v = v_ref[0]                                  # (tk, hpb*hd)
    # int8 mask block -> bool "masked out" predicate, computed once per KV tile.
    neg = None
    if mask_ref is not None:
        neg = mask_ref[0].astype(jnp.int32) == 0  # (tq, tk) or (1, tk)

    hd = head_dim
    for h in range(heads_per_block):              # small static unroll (1 or 2 typical)
        sl = slice(h * hd, (h + 1) * hd)
        # energy_h = Q_h @ K_h^T   (contract last dims, no explicit transpose)
        s = jax.lax.dot_general(
            q[:, sl], k[:, sl], (((1,), (1,)), ((), ())),
            preferred_element_type=jnp.float32,
        )                                          # (tq, tk) f32
        if neg is not None:
            s = jnp.where(neg, jnp.float32(-1e10), s)

        m_prev = m_sc[h]                           # (tq, 1)
        m_new = jnp.maximum(m_prev, jnp.max(s, axis=-1, keepdims=True))
        alpha = jnp.exp(m_prev - m_new)
        p = jnp.exp(s - m_new)                     # f32 (softmax math stays f32)
        l_sc[h] = alpha * l_sc[h] + jnp.sum(p, axis=-1, keepdims=True)
        acc_sc[h] = alpha * acc_sc[h] + jnp.dot(
            p.astype(v.dtype), v[:, sl], preferred_element_type=jnp.float32
        )                                          # full-slab RMW, no lane masking
        m_sc[h] = m_new

    @pl.when(kv_idx == pl.num_programs(3) - 1)
    def _finalize():
        inv = pl.reciprocal(l_sc[...], approx=True)            # (hpb, tq, 1)
        out = acc_sc[...] * inv                                # one full-width multiply
        if heads_per_block == 1:
            o_ref[0] = out[0].astype(o_ref.dtype)
        else:
            o_ref[0] = jnp.concatenate(
                [out[h] for h in range(heads_per_block)], axis=-1
            ).astype(o_ref.dtype)                              # single lane-dense store


def _mha_flash_kernel(q_ref, k_ref, v_ref, o_ref, m_sc, l_sc, acc_sc,
                      *, heads_per_block, head_dim):
    _flash_attn_body(q_ref, k_ref, v_ref, None, o_ref, m_sc, l_sc, acc_sc,
                     heads_per_block=heads_per_block, head_dim=head_dim)


def _mha_flash_masked_kernel(q_ref, k_ref, v_ref, mask_ref, o_ref,
                             m_sc, l_sc, acc_sc, *, heads_per_block, head_dim):
    _flash_attn_body(q_ref, k_ref, v_ref, mask_ref, o_ref, m_sc, l_sc, acc_sc,
                     heads_per_block=heads_per_block, head_dim=head_dim)


def _row_block_map(off):
    def index_map(b, hb, qi, ki):
        return (b, qi, hb + off)
    return index_map


def _col_block_map(off):
    def index_map(b, hb, qi, ki):
        return (b, ki, hb + off)
    return index_map


def attention(q_arr, k_arr, v_arr, mask, *, d_model, n_heads,
              q_off=0, k_off=0, v_off=0, tq_target=256, tk_target=512):
    # q_arr: [B, Sq, Dq], k_arr/v_arr: [B, Sk, Dk]; the last axis is addressed
    # in head-block units via the *_off block offsets (fused-QKV support).
    # mask: None, [B, Sq, Sk] int8, or [B, 1, Sk] int8 (key-only padding mask).
    B, Sq = q_arr.shape[0], q_arr.shape[1]
    Sk = k_arr.shape[1]
    hd = d_model // n_heads
    hpb = _heads_per_block(n_heads, hd)
    n_hblk = n_heads // hpb
    d_blk = hpb * hd
    itemsize = q_arr.dtype.itemsize

    # Keep double-buffered K/V tiles within a conservative VMEM budget
    # (matters on v7x's 64 MiB VMEM at large d_model).
    while tk_target > 128 and 4 * tk_target * d_blk * itemsize > (16 << 20):
        tk_target //= 2
    # Make sure there are >= 2 parallel grid iterations (v7x has 2 TensorCores).
    if B * n_hblk == 1 and Sq >= 16:
        tq_target = min(tq_target, max(8, (Sq // 2) // 8 * 8))

    tq = _pick_tile(Sq, tq_target, 8)
    tk = _pick_tile(Sk, tk_target, 128)
    grid = (B, n_hblk, Sq // tq, Sk // tk)

    in_specs = [
        pl.BlockSpec((1, tq, d_blk), _row_block_map(q_off)),
        pl.BlockSpec((1, tk, d_blk), _col_block_map(k_off)),
        pl.BlockSpec((1, tk, d_blk), _col_block_map(v_off)),
    ]
    operands = [q_arr, k_arr, v_arr]
    mask_bytes = 0
    if mask is not None:
        if mask.shape[1] == 1:      # key-only (padding) mask, broadcast in-kernel
            in_specs.append(
                pl.BlockSpec((1, 1, tk), lambda b, hb, qi, ki: (b, 0, ki)))
        else:                       # full [B, Sq, Sk] mask
            in_specs.append(
                pl.BlockSpec((1, tq, tk), lambda b, hb, qi, ki: (b, qi, ki)))
        operands.append(mask)
        mask_bytes = mask.size
        kern = functools.partial(_mha_flash_masked_kernel,
                                 heads_per_block=hpb, head_dim=hd)
    else:
        kern = functools.partial(_mha_flash_kernel,
                                 heads_per_block=hpb, head_dim=hd)

    cost = pl.CostEstimate(
        flops=int(4 * B * n_heads * Sq * Sk * hd),
        transcendentals=int(B * n_heads * Sq * Sk),
        bytes_accessed=int(B * (2 * Sq + 2 * Sk) * d_model * itemsize + mask_bytes),
    )
    return pl.pallas_call(
        kern,
        out_shape=jax.ShapeDtypeStruct((B, Sq, d_model), q_arr.dtype),
        grid=grid,
        in_specs=in_specs,
        out_specs=pl.BlockSpec((1, tq, d_blk), lambda b, hb, qi, ki: (b, qi, hb)),
        scratch_shapes=[
            pltpu.VMEM((hpb, tq, 1), jnp.float32),    # running max m (head-major)
            pltpu.VMEM((hpb, tq, 1), jnp.float32),    # running denom l
            pltpu.VMEM((hpb, tq, hd), jnp.float32),   # per-head accumulator
        ],
        compiler_params=pltpu.CompilerParams(
            dimension_semantics=("parallel", "parallel", "parallel", "arbitrary")
        ),
        cost_estimate=cost,
    )(*operands)


# ----------------------------------------------------------------------------
# Module wrapper
# ----------------------------------------------------------------------------
class MultiHeadAttentionPallas:
    def __init__(self, d_model, n_heads, dropout, key, compute_dtype=jnp.float32):
        assert d_model % n_heads == 0
        self.d_model = d_model
        self.n_heads = n_heads
        self.head_dim = d_model // n_heads
        self.scale = float(self.head_dim) ** 0.5
        self.dropout = dropout            # identity at inference (see TODO above)
        self.compute_dtype = compute_dtype

        ks = jax.random.split(key, 8)
        # Master weights stored pre-transposed [d_in, d_out] so kernels do x @ W.
        init_w = lambda k: jax.random.normal(k, (d_model, d_model), jnp.float32) * 0.02
        init_b = lambda k: jax.random.normal(k, (d_model,), jnp.float32) * 0.02
        self.Wq, self.bq = init_w(ks[0]), init_b(ks[1])
        self.Wk, self.bk = init_w(ks[2]), init_b(ks[3])
        self.Wv, self.bv = init_w(ks[4]), init_b(ks[5])
        self.Wo, self.bo = init_w(ks[6]), init_b(ks[7])

        cd = compute_dtype
        scale_inv = 1.0 / self.scale
        # 1/scale folded into the Q projection in f32, before any dtype cast.
        self._Wq = (self.Wq * scale_inv).astype(cd)
        self._Wk = self.Wk.astype(cd)
        self._Wv = self.Wv.astype(cd)
        self._Wo = self.Wo.astype(cd)
        self._bq = (self.bq * scale_inv).reshape(1, -1)     # biases stay f32
        self._bk = self.bk.reshape(1, -1)
        self._bv = self.bv.reshape(1, -1)
        self._bo = self.bo.reshape(1, -1)
        # Fused-QKV weights: only used when d_model % 128 == 0 so the packed
        # (B, S, 3D) projection can be consumed via lane-block index_maps
        # (no wrapper slices / XLA copies between the two kernels).
        self._use_fused_qkv = (d_model % 128 == 0)
        if self._use_fused_qkv:
            self._Wqkv = jnp.concatenate(
                [self.Wq * scale_inv, self.Wk, self.Wv], axis=1).astype(cd)
            self._bqkv = jnp.concatenate(
                [self.bq * scale_inv, self.bk, self.bv]).reshape(1, -1)

    @staticmethod
    def _prepare_mask(mask, B, Sq, Sk):
        if mask is None:
            return None
        m = jnp.asarray(mask)
        if m.ndim == 4:
            # TODO(synk): true per-head masks unsupported; the head axis must be
            # broadcastable (size 1), as in standard padding/causal masks.
            m = m[:, 0]
        if m.ndim == 2:
            m = m[None]
        m = (m != 0)
        if m.shape[-2] == 1:
            # key-only (padding) mask: [B, 1, Sk] int8 — no Sq duplication.
            return jnp.broadcast_to(m, (B, 1, Sk)).astype(jnp.int8)
        return jnp.broadcast_to(m, (B, Sq, Sk)).astype(jnp.int8)

    def __call__(self, query, key, value, mask=None):
        B, Sq, D = query.shape
        Sk = key.shape[1]
        cd = self.compute_dtype
        mask_arr = self._prepare_mask(mask, B, Sq, Sk)

        if self._use_fused_qkv and (query is key) and (key is value):
            # One tiled matmul; Q/K/V head blocks are addressed directly inside
            # the packed (B, S, 3D) output by the attention BlockSpecs.
            hpb = _heads_per_block(self.n_heads, self.head_dim)
            n_hblk = self.n_heads // hpb
            qkv = linear(query.reshape(B * Sq, D).astype(cd), self._Wqkv, self._bqkv)
            qkv = qkv.reshape(B, Sq, 3 * D)
            ctx = attention(qkv, qkv, qkv, mask_arr,
                            d_model=D, n_heads=self.n_heads,
                            q_off=0, k_off=n_hblk, v_off=2 * n_hblk)
        else:
            Q = linear(query.reshape(B * Sq, D).astype(cd), self._Wq, self._bq)
            K = linear(key.reshape(B * Sk, D).astype(cd), self._Wk, self._bk)
            V = linear(value.reshape(B * Sk, D).astype(cd), self._Wv, self._bv)
            ctx = attention(Q.reshape(B, Sq, D), K.reshape(B, Sk, D),
                            V.reshape(B, Sk, D), mask_arr,
                            d_model=D, n_heads=self.n_heads)

        out = linear(ctx.reshape(B * Sq, D), self._Wo, self._bo)
        return out.reshape(B, Sq, D)

    # pure-JAX f32 reference (same math as the PyTorch module) for checking
    def reference(self, query, key, value, mask=None):
        B, Sq, D = query.shape
        Sk = key.shape[1]
        H, hd = self.n_heads, self.head_dim
        Q = query @ self.Wq + self.bq
        K = key @ self.Wk + self.bk
        V = value @ self.Wv + self.bv
        Q = Q.reshape(B, Sq, H, hd).transpose(0, 2, 1, 3)
        K = K.reshape(B, Sk, H, hd).transpose(0, 2, 1, 3)
        V = V.reshape(B, Sk, H, hd).transpose(0, 2, 1, 3)
        energy = jnp.einsum("bhqd,bhkd->bhqk", Q, K) / self.scale
        if mask is not None:
            energy = jnp.where(mask == 0, -1e10, energy)
        attn = jax.nn.softmax(energy, axis=-1)
        x = jnp.einsum("bhqk,bhkd->bhqd", attn, V)
        x = x.transpose(0, 2, 1, 3).reshape(B, Sq, D)
        return x @ self.Wo + self.bo


if __name__ == "__main__":
    def check(name, got, want, atol, rtol):
        assert got.shape == want.shape, f"{name}: shape {got.shape} vs {want.shape}"
        ok = jnp.allclose(got.astype(jnp.float32), want, atol=atol, rtol=rtol)
        assert bool(ok), f"{name}: mismatch"

    root = jax.random.PRNGKey(0)
    k_mod, k_q, k_k, k_v, k_mod2, k_x2 = jax.random.split(root, 6)

    # ----- config 1: tiny d_model (head_dim=8 -> all heads in one lane block) -----
    d_model, n_heads, B, S = 32, 4, 2, 8
    query = jax.random.normal(k_q, (B, S, d_model), jnp.float32)
    key_in = jax.random.normal(k_k, (B, S, d_model), jnp.float32)
    value = jax.random.normal(k_v, (B, S, d_model), jnp.float32)
    causal = jnp.tril(jnp.ones((S, S), jnp.int32)).reshape(1, 1, S, S)
    pad = jnp.ones((B, 1, 1, S), jnp.int32).at[:, :, :, S // 2:].set(0)

    mha = MultiHeadAttentionPallas(d_model, n_heads, 0.1, k_mod)

    out = jax.block_until_ready(mha(query, key_in, value, mask=None))
    check("no-mask", out, mha.reference(query, key_in, value, mask=None), 2e-3, 2e-3)

    out = jax.block_until_ready(mha(query, key_in, value, mask=causal))
    check("causal", out, mha.reference(query, key_in, value, mask=causal), 2e-3, 2e-3)

    out = jax.block_until_ready(mha(query, key_in, value, mask=pad))
    check("padding", out, mha.reference(query, key_in, value, mask=pad), 2e-3, 2e-3)

    out = jax.block_until_ready(mha(query, query, query, mask=causal))
    check("self-attn", out, mha.reference(query, query, query, mask=causal), 2e-3, 2e-3)

    # bf16 MXU path (softmax / accumulation stay f32)
    mha_b = MultiHeadAttentionPallas(d_model, n_heads, 0.1, k_mod,
                                     compute_dtype=jnp.bfloat16)
    out = jax.block_until_ready(mha_b(query, key_in, value, mask=causal))
    check("bf16", out, mha_b.reference(query, key_in, value, mask=causal), 5e-2, 5e-2)

    # ----- config 2: head_dim=128 (head-block grid axis + fused lane-block QKV) -----
    d2, h2, B2, S2 = 256, 2, 1, 16
    x2 = jax.random.normal(k_x2, (B2, S2, d2), jnp.float32)
    causal2 = jnp.tril(jnp.ones((S2, S2), jnp.int32)).reshape(1, 1, S2, S2)
    mha2 = MultiHeadAttentionPallas(d2, h2, 0.0, k_mod2)
    out = jax.block_until_ready(mha2(x2, x2, x2, mask=causal2))   # fused-QKV view path
    check("fused-qkv hd128", out, mha2.reference(x2, x2, x2, mask=causal2), 2e-3, 2e-3)

    print("KERNEL_OK")
</pallas_src>

<mosaic_0001>
module attributes {stable_mosaic.version = 11 : i64} {
  func.func @_linear_kernel(%arg0: i32, %arg1: i32, %arg2: i32, %arg3: memref<16x32xf32, #tpu.memory_space<vmem>>, %arg4: memref<32x32xf32, #tpu.memory_space<vmem>>, %arg5: memref<1x32xf32, #tpu.memory_space<vmem>>, %arg6: memref<16x32xf32, #tpu.memory_space<vmem>>, %arg7: memref<16x32xf32, #tpu.memory_space<vmem>>) attributes {dimension_semantics = [#tpu.dimension_semantics<parallel>, #tpu.dimension_semantics<parallel>, #tpu.dimension_semantics<arbitrary>], iteration_bounds = array<i64: 1, 1, 1>, scalar_prefetch = 0 : i64, scratch_operands = 1 : i64, tpu.core_type = #tpu.core_type<tc>, window_params = [{transform_indices = @transform_0, window_bounds = array<i64: 16, 32>}, {transform_indices = @transform_1, window_bounds = array<i64: 32, 32>}, {transform_indices = @transform_2, window_bounds = array<i64: 1, 32>}, {transform_indices = @transform_3, window_bounds = array<i64: 16, 32>}]} {
    %c0_i32 = arith.constant 0 : i32
    %0 = arith.cmpi eq, %arg2, %c0_i32 : i32
    %1 = arith.extui %0 : i1 to i32
    %c0_i32_0 = arith.constant 0 : i32
    %2 = arith.cmpi ne, %1, %c0_i32_0 : i32
    scf.if %2 {
      %cst_10 = arith.constant 0.000000e+00 : f32
      %12 = vector.broadcast %cst_10 : f32 to vector<16x32xf32>
      %c0_11 = arith.constant 0 : index
      %c0_12 = arith.constant 0 : index
      %13 = vector.load %arg7[%c0_11, %c0_12] : memref<16x32xf32, #tpu.memory_space<vmem>>, vector<16x32xf32>
      tpu.vector_store %arg7[%c0_11, %c0_12], %12 {strides = array<i32>} : memref<16x32xf32, #tpu.memory_space<vmem>>, vector<16x32xf32>,
    } else {
    }
    %c0 = arith.constant 0 : index
    %c0_1 = arith.constant 0 : index
    %3 = vector.load %arg7[%c0, %c0_1] : memref<16x32xf32, #tpu.memory_space<vmem>>, vector<16x32xf32>
    %c0_2 = arith.constant 0 : index
    %c0_3 = arith.constant 0 : index
    %4 = vector.load %arg3[%c0_2, %c0_3] : memref<16x32xf32, #tpu.memory_space<vmem>>, vector<16x32xf32>
    %c0_4 = arith.constant 0 : index
    %c0_5 = arith.constant 0 : index
    %5 = vector.load %arg4[%c0_4, %c0_5] : memref<32x32xf32, #tpu.memory_space<vmem>>, vector<32x32xf32>
    %cst = arith.constant dense<0.000000e+00> : vector<16x32xf32>
    %6 = tpu.matmul %4, %5, %cst {dimension_numbers = #tpu.dot_dimension_numbers<[1], [0], [0], [1], [0, 0, 1, 1], [], []>} : vector<16x32xf32>, vector<32x32xf32>, vector<16x32xf32> -> vector<16x32xf32>
    %7 = arith.addf %3, %6 : vector<16x32xf32>
    %c0_6 = arith.constant 0 : index
    %c0_7 = arith.constant 0 : index
    %8 = vector.load %arg7[%c0_6, %c0_7] : memref<16x32xf32, #tpu.memory_space<vmem>>, vector<16x32xf32>
    tpu.vector_store %arg7[%c0_6, %c0_7], %7 {strides = array<i32>} : memref<16x32xf32, #tpu.memory_space<vmem>>, vector<16x32xf32>,
    %c0_i32_8 = arith.constant 0 : i32
    %9 = arith.cmpi eq, %arg2, %c0_i32_8 : i32
    %10 = arith.extui %9 : i1 to i32
    %c0_i32_9 = arith.constant 0 : i32
    %11 = arith.cmpi ne, %10, %c0_i32_9 : i32
    scf.if %11 {
      %c0_10 = arith.constant 0 : index
      %c0_11 = arith.constant 0 : index
      %12 = vector.load %arg7[%c0_10, %c0_11] : memref<16x32xf32, #tpu.memory_space<vmem>>, vector<16x32xf32>
      %c0_12 = arith.constant 0 : index
      %c0_13 = arith.constant 0 : index
      %13 = vector.load %arg5[%c0_12, %c0_13] : memref<1x32xf32, #tpu.memory_space<vmem>>, vector<1x32xf32>
      %14 = vector.broadcast %13 : vector<1x32xf32> to vector<16x32xf32>
      %15 = arith.addf %12, %14 : vector<16x32xf32>
      %c0_14 = arith.constant 0 : index
      %c0_15 = arith.constant 0 : index
      %16 = vector.load %arg6[%c0_14, %c0_15] : memref<16x32xf32, #tpu.memory_space<vmem>>, vector<16x32xf32>
      tpu.vector_store %arg6[%c0_14, %c0_15], %15 {strides = array<i32>} : memref<16x32xf32, #tpu.memory_space<vmem>>, vector<16x32xf32>,
    } else {
    }
    return
  }
  func.func @transform_0(%arg0: i32, %arg1: i32, %arg2: i32) -> (i32, i32) {
    %c0_i32 = arith.constant 0 : i32
    return %arg0, %arg2 : i32, i32
  }
  func.func @transform_1(%arg0: i32, %arg1: i32, %arg2: i32) -> (i32, i32) {
    %c0_i32 = arith.constant 0 : i32
    return %arg2, %arg1 : i32, i32
  }
  func.func @transform_2(%arg0: i32, %arg1: i32, %arg2: i32) -> (i32, i32) {
    %c0_i32 = arith.constant 0 : i32
    %c0_i32_0 = arith.constant 0 : i32
    return %c0_i32, %arg1 : i32, i32
  }
  func.func @transform_3(%arg0: i32, %arg1: i32, %arg2: i32) -> (i32, i32) {
    %c0_i32 = arith.constant 0 : i32
    return %arg0, %arg1 : i32, i32
  }
}

</mosaic_0001>

<llo_original>
// kernel: tpu_custom_call.1
$region0: #{tpu_custom_call.1}
  #allocation0 [shape = 'u32[]', space=smem, size = 0x4, offset = 0x4, fixed_abs, tag = 'smem constant byte address 0x4 - core index']
  #allocation1 [shape = 'u32[72,128]{1,0:T(1,128)}', space=vmem, size = 0x9000, scoped, tag = 'internal scratch']
  #allocation2 [shape = 'f32[16,32]{1,0:T(8,128)}', space=vmem, size = 0x2000, scoped, tag = 'scratch operand']
  %s0 = inlined_call_operand.hbm [shape: f32[16,32], index: 0, kind: input, shape index: {}]
  %s1 = inlined_call_operand.hbm [shape: f32[32,32], index: 1, kind: input, shape index: {}]
  %s2 = inlined_call_operand.vmem [shape: f32[1,32], index: 2, kind: input, shape index: {}]
  %s3 = inlined_call_operand.hbm [shape: f32[16,32], index: 3, kind: output, shape index: {}]
  %s4 = sld [smem:[#allocation0]]
  $region38: #{tpu_custom_call.1} parent=0
    _
  %s6 = ssub.s32 1, %s4
  %s7 = scalar_select 0, %s6, %s4
  $region1: #{tpu_custom_call.1} parent=0
    #allocation3 [shape = 'u8[8192]{0}', space=vmem, size = 0x2000, scoped, tag = 'input window, operand 0, single buffered']
    #allocation4 [shape = 's32[1]{0}', space=sflag, size = 0x4, scoped, tag = 'scoped memory for tpu_custom_call.1']
    #allocation5 [shape = 's32[1]{0}', space=sflag, size = 0x4, scoped, tag = 'scoped memory for tpu_custom_call.1']
    #allocation6 [shape = 'u8[16384]{0}', space=vmem, size = 0x4000, scoped, tag = 'input window, operand 1, single buffered']
    #allocation7 [shape = 's32[1]{0}', space=sflag, size = 0x4, scoped, tag = 'scoped memory for tpu_custom_call.1']
    #allocation8 [shape = 'u8[8192]{0}', space=vmem, size = 0x2000, scoped, tag = 'output window, operand 0, single buffered']
    %8 = vsyncpa [#allocation4], 0
    %9 = vsyncpa [#allocation7], 0
    %10 = vsyncpa [#allocation5], 0
    // Predicated region
    $region2: #{tpu_custom_call.1} parent=1 // pred_check
      _
    $region3: #{tpu_custom_call.1} parent=1 // pred_check_branch
      %12 = sbr.rel (0) target = $region5
    $region4: #{tpu_custom_call.1} parent=1 // pred_region
      %14 = vsyncadd [#allocation4], 0
      %s15 = sshll.u32 %s0, 4
      %s16 = int_to_ptr.hbm [resolvable:$true] %s15
      %s17 = sshll.u32 [#allocation3], 4
      %s18 = int_to_ptr.vmem [resolvable:$true] %s17
      %23 = dma.hbm_to_vmem [thread:$0]  %s16, 256, %s18, [#allocation4], 128, 128, 8
    $region5: #{tpu_custom_call.1} parent=1 // pred_fallthru
      _
    // Predicated region
    $region6: #{tpu_custom_call.1} parent=1 // pred_check
      _
    $region7: #{tpu_custom_call.1} parent=1 // pred_check_branch
      %25 = sbr.rel (0) target = $region9
    $region8: #{tpu_custom_call.1} parent=1 // pred_region
      %27 = vsyncadd [#allocation7], 0
      %s28 = sshll.u32 %s1, 4
      %s29 = int_to_ptr.hbm [resolvable:$true] %s28
      %s30 = sshll.u32 [#allocation6], 4
      %s31 = int_to_ptr.vmem [resolvable:$true] %s30
      %36 = dma.hbm_to_vmem [thread:$0]  %s29, 512, %s31, [#allocation7], 128, 128, 8
    $region9: #{tpu_custom_call.1} parent=1 // pred_fallthru
      _
    // Predicated region
    $region10: #{tpu_custom_call.1} parent=1 // pred_check
      _
    $region11: #{tpu_custom_call.1} parent=1 // pred_check_branch
      %38 = sbr.rel (0) target = $region13
    $region12: #{tpu_custom_call.1} parent=1 // pred_region
      _
    $region13: #{tpu_custom_call.1} parent=1 // pred_fallthru
      _
    // Predicated region
    $region14: #{tpu_custom_call.1} parent=1 // pred_check
      _
    $region15: #{tpu_custom_call.1} parent=1 // pred_check_branch
      %40 = sbr.rel (0) target = $region17
    $region16: #{tpu_custom_call.1} parent=1 // pred_region
      %42 = dma.done [#allocation4], 256
    $region17: #{tpu_custom_call.1} parent=1 // pred_fallthru
      _
    // Predicated region
    $region18: #{tpu_custom_call.1} parent=1 // pred_check
      _
    $region19: #{tpu_custom_call.1} parent=1 // pred_check_branch
      %44 = sbr.rel (0) target = $region21
    $region20: #{tpu_custom_call.1} parent=1 // pred_region
      %46 = dma.done [#allocation7], 512
    $region21: #{tpu_custom_call.1} parent=1 // pred_fallthru
      _
    %p47 = scmp.eq.s32.totalorder 0, 0
    // Predicated region
    $region22: #{tpu_custom_call.1} parent=1 // pred_check
      %p48 = pneg %p47
    $region23: #{tpu_custom_call.1} parent=1 // pred_check_branch
      %50 = sbr.rel (%p48) target = $region25
    $region24: #{tpu_custom_call.1} parent=1 // pred_region
      %vm51 = vcmask 261120
      %52 = vst.msk [vmem:[#allocation2] sm:$0xff] %vm51, 0.0
      %53 = vst.msk [vmem:[#allocation2 + $0x8] sm:$0xff] %vm51, 0.0
    $region25: #{tpu_custom_call.1} parent=1 // pred_fallthru
      _
    %v54 = vld [vmem:[#allocation2] sm:$0xff]
    %v55 = vld [vmem:[#allocation2 + $0x8] sm:$0xff]
    %v56 = vld [vmem:[#allocation3] sm:$0xff]
    %v57 = vld [vmem:[#allocation3 + $0x8] sm:$0xff]
    %v58 = vld [vmem:[#allocation6] sm:$0xff]
    %v59 = vld [vmem:[#allocation6 + $0x8] sm:$0xff]
    %v60 = vld [vmem:[#allocation6 + $0x10] sm:$0xff]
    %v61 = vld [vmem:[#allocation6 + $0x18] sm:$0xff]
    %vm62 = vcmask 261120
    %v64 = vsel %vm62, %v56, 0
    %v67 = vsel %vm62, %v57, 0
    %69 = vmatpush.msra.mxu0 0.0
    %70 = vmatpush.msra.mxu0 0.0
    %71 = vmatpush.msra.mxu0 0.0
    %72 = vmatpush.msra.mxu0 0.0
    %73 = vmatpush.msra.mxu0 0.0
    %74 = vmatpush.msra.mxu0 0.0
    %75 = vmatpush.msra.mxu0 0.0
    %76 = vmatpush.msra.mxu0 0.0
    %77 = vmatpush.msra.mxu0 0.0
    %78 = vmatpush.msra.mxu0 0.0
    %79 = vmatpush.msra.mxu0 0.0
    %80 = vmatpush.msra.mxu0 0.0
    %81 = vmatpush.msra.mxu0 %v61
    %82 = vmatpush.msra.mxu0 %v60
    %83 = vmatpush.msra.mxu0 %v59
    %84 = vmatpush.msra.mxu0 %v58
    %85 = vmatmul.f32.gmra.mxu0 %v64
    %v86 = vpop.f32.mrf.mxu0
    %v87 = vadd.f32 0.0, %v86
    %88 = vmatmul.f32.gmra.mxu0 %v67
    %v89 = vpop.f32.mrf.mxu0
    %v90 = vadd.f32 0.0, %v89
    %91 = vdwg.mxu0
    %v92 = vadd.f32 %v54, %v87
    %v93 = vadd.f32 %v55, %v90
    %94 = vst.msk [vmem:[#allocation2] sm:$0xff] %vm62, %v92
    %95 = vst.msk [vmem:[#allocation2 + $0x8] sm:$0xff] %vm62, %v93
    // Predicated region
    $region26: #{tpu_custom_call.1} parent=1 // pred_check
      %p96 = pneg %p47
    $region27: #{tpu_custom_call.1} parent=1 // pred_check_branch
      %98 = sbr.rel (%p96) target = $region29
    $region28: #{tpu_custom_call.1} parent=1 // pred_region
      %v99 = vld [vmem:[#allocation2] sm:$0xff]
      %v100 = vld [vmem:[#allocation2 + $0x8] sm:$0xff]
      %v101 = vld [vmem:[%s2] sm:$0x1]
      %v103 = vperm.slane %v101, 0
      %v105 = vadd.f32 %v99, %v103
      %v106 = vadd.f32 %v100, %v103
      %107 = vst.msk [vmem:[#allocation8] sm:$0xff] %vm62, %v105
      %108 = vst.msk [vmem:[#allocation8 + $0x8] sm:$0xff] %vm62, %v106
    $region29: #{tpu_custom_call.1} parent=1 // pred_fallthru
      _
    // Predicated region
    $region30: #{tpu_custom_call.1} parent=1 // pred_check
      _
    $region31: #{tpu_custom_call.1} parent=1 // pred_check_branch
      %110 = sbr.rel (0) target = $region33
    $region32: #{tpu_custom_call.1} parent=1 // pred_region
      %112 = vsyncadd [#allocation5], 0
      %s113 = sshll.u32 [#allocation8], 4
      %s114 = int_to_ptr.vmem [resolvable:$true] %s113
      %s115 = sshll.u32 %s3, 4
      %s116 = int_to_ptr.hbm [resolvable:$true] %s115
      %121 = dma.vmem_to_hbm [thread:$0]  %s114, 256, %s116, [#allocation5], 128, 128, 8
    $region33: #{tpu_custom_call.1} parent=1 // pred_fallthru
      _
    // Predicated region
    $region34: #{tpu_custom_call.1} parent=1 // pred_check
      _
    $region35: #{tpu_custom_call.1} parent=1 // pred_check_branch
      %123 = sbr.rel (0) target = $region37
    $region36: #{tpu_custom_call.1} parent=1 // pred_region
      %125 = dma.done [#allocation5], 256
    $region37: #{tpu_custom_call.1} parent=1 // pred_fallthru
      _
    %126 = vsyncpa [#allocation4], 1
    %127 = vsyncpa [#allocation7], 1
    %128 = vsyncpa [#allocation5], 1

</llo_original>
